<compile_context>
chip_gen: v7x
topology: tpu7x:2x2x1
jax: 0.10.0
libtpu: 0.0.40
codegen_flags: <defaults>
</compile_context>

<pallas_src>
import functools

import jax
import jax.numpy as jnp
from jax import lax
from jax.experimental import pallas as pl
from jax.experimental.pallas import tpu as pltpu


def _round_up(x, m):
    return ((x + m - 1) // m) * m


def _vmem_budget_bytes():
    """Usable VMEM: physical capacity minus headroom for compiler scratch."""
    try:
        cap = int(pltpu.get_tpu_info().vmem_capacity_bytes)
    except Exception:  # conservative (v7x-sized) fallback
        cap = 64 * 1024 * 1024
    return max(cap - 8 * 1024 * 1024, 16 * 1024 * 1024)


# ---------------------------------------------------------------------------
# Kernels
# ---------------------------------------------------------------------------
def _scores_softmax_kernel(v_ref, enc_ref, out_ref):
    """Scores + softmax for a tile of independent queries (full S per step).

    v_ref:   (Bt, 1, H0)  fused query rows (lane-dense)
    enc_ref: (Bt, S, H0)  encoder outputs, natural layout
    out_ref: (Bt, 1, S)   softmax attention weights (lane-dense row)
    """
    scores = jnp.einsum(
        "bqh,bsh->bqs", v_ref[...], enc_ref[...],
        preferred_element_type=jnp.float32)              # MXU contraction over H0
    m = jnp.max(scores, axis=-1, keepdims=True)
    p = jnp.exp(scores - m)
    denom = jnp.sum(p, axis=-1, keepdims=True)
    out_ref[...] = p / denom                             # exact normalization


def _make_seq_tiled_kernel(s_valid):
    """Sequence-tiled kernel: per-tile scores accumulate in a resident VMEM
    scratch; the exact softmax is finalized on the last S step."""

    def kernel(v_ref, enc_ref, out_ref, scr_ref):
        # v_ref:   (Bt, 1, H0)
        # enc_ref: (Bt, St, H0)      -- S tile `s`
        # out_ref: (nS, Bt, 1, St)   -- resident across the S axis
        # scr_ref: (nS, Bt, 1, St)   -- f32 scores scratch
        s = pl.program_id(1)
        n_s = pl.num_programs(1)
        scr_ref[s] = jnp.einsum(
            "bqh,bsh->bqs", v_ref[...], enc_ref[...],
            preferred_element_type=jnp.float32)          # (Bt, 1, St)

        @pl.when(s == n_s - 1)
        def _finalize():
            n_sp, _, _, st = scr_ref.shape
            col = (lax.broadcasted_iota(jnp.int32, (n_sp, 1, 1, st), 0) * st
                   + lax.broadcasted_iota(jnp.int32, (n_sp, 1, 1, st), 3))
            scores = jnp.where(col < s_valid, scr_ref[...], -jnp.inf)
            m = jnp.max(jnp.max(scores, axis=3, keepdims=True),
                        axis=0, keepdims=True)
            p = jnp.exp(scores - m)
            denom = jnp.sum(jnp.sum(p, axis=3, keepdims=True),
                            axis=0, keepdims=True)
            out_ref[...] = p / denom

    return kernel


# ---------------------------------------------------------------------------
# Call paths
# ---------------------------------------------------------------------------
def _single_shot_call(v_row, enc, budget):
    b, s, h0 = enc.shape
    enc_bytes = b * _round_up(s, 8) * _round_up(h0, 128) * 4
    v_bytes = b * 8 * _round_up(h0, 128) * 4
    out_bytes = b * 8 * _round_up(s, 128) * 4
    limit = int(min(budget, max(2 * (enc_bytes + v_bytes + out_bytes),
                                16 * 1024 * 1024)))
    return pl.pallas_call(
        _scores_softmax_kernel,
        out_shape=jax.ShapeDtypeStruct((b, 1, s), jnp.float32),
        compiler_params=pltpu.CompilerParams(vmem_limit_bytes=limit),
    )(v_row, enc)


def _batch_tiled_call(v_row, enc, bt, budget):
    b, s, h0 = enc.shape
    enc_blk = bt * _round_up(s, 8) * _round_up(h0, 128) * 4
    v_blk = bt * 8 * _round_up(h0, 128) * 4
    out_blk = bt * 8 * _round_up(s, 128) * 4
    per_step = enc_blk + v_blk + out_blk
    limit = int(min(budget, max(4 * per_step, 16 * 1024 * 1024)))
    return pl.pallas_call(
        _scores_softmax_kernel,
        out_shape=jax.ShapeDtypeStruct((b, 1, s), jnp.float32),
        grid=(pl.cdiv(b, bt),),
        in_specs=[
            pl.BlockSpec((bt, 1, h0), lambda i: (i, 0, 0)),
            pl.BlockSpec((bt, s, h0), lambda i: (i, 0, 0)),
        ],
        out_specs=pl.BlockSpec((bt, 1, s), lambda i: (i, 0, 0)),
        compiler_params=pltpu.CompilerParams(
            dimension_semantics=("parallel",),
            vmem_limit_bytes=limit),
    )(v_row, enc)


def _seq_tiled_call(v_row, enc, bt, st, budget):
    b, s, h0 = enc.shape
    n_s = pl.cdiv(s, st)
    enc_blk = bt * _round_up(st, 8) * _round_up(h0, 128) * 4
    v_blk = bt * 8 * _round_up(h0, 128) * 4
    resident = 2 * n_s * bt * 8 * _round_up(st, 128) * 4   # scratch + out block
    per_step = 2 * (enc_blk + v_blk) + resident
    limit = int(min(budget, max(2 * per_step, 16 * 1024 * 1024)))
    out = pl.pallas_call(
        _make_seq_tiled_kernel(s),
        out_shape=jax.ShapeDtypeStruct((n_s, b, 1, st), jnp.float32),
        grid=(pl.cdiv(b, bt), n_s),
        in_specs=[
            pl.BlockSpec((bt, 1, h0), lambda i, j: (i, 0, 0)),
            pl.BlockSpec((bt, st, h0), lambda i, j: (i, j, 0)),
        ],
        out_specs=pl.BlockSpec((n_s, bt, 1, st), lambda i, j: (0, i, 0, 0)),
        scratch_shapes=[pltpu.VMEM((n_s, bt, 1, st), jnp.float32)],
        compiler_params=pltpu.CompilerParams(
            dimension_semantics=("parallel", "arbitrary"),
            vmem_limit_bytes=limit),
    )(v_row, enc)
    # (nS, B, 1, St) -> (B, 1, nS*St), trim the sequence padding.  This
    # wrapper-side relayout touches only B*S*4 bytes (negligible).
    probs = jnp.transpose(out, (1, 2, 0, 3)).reshape(b, 1, n_s * st)
    return probs[:, :, :s]


# ---------------------------------------------------------------------------
# Tile heuristics (trace-time, static shapes; byte estimates use 4B = f32,
# which is conservative for the optional bf16 path)
# ---------------------------------------------------------------------------
def _pick_batch_tile(b, s, h0, budget):
    row = (_round_up(s, 8) * _round_up(h0, 128) * 4        # enc
           + 8 * _round_up(h0, 128) * 4                    # v
           + 8 * _round_up(s, 128) * 4)                    # out
    target = 2 * 1024 * 1024                               # ~MB-class DMAs/step
    bt = min(b, max(1, target // row), max(1, (budget // 4) // (2 * row)))
    return int(max(1, bt))


def _pick_seq_tiles(b, s, h0, budget, seq_block):
    st = 512 if seq_block is None else int(seq_block)
    st = min(_round_up(st, 128), _round_up(s, 128))
    n_s = pl.cdiv(s, st)
    enc_row = _round_up(st, 8) * _round_up(h0, 128) * 4
    v_row = 8 * _round_up(h0, 128) * 4
    resident_row = 2 * n_s * 8 * _round_up(st, 128) * 4
    per_row = 2 * (enc_row + v_row) + resident_row
    target = 2 * 1024 * 1024
    bt = min(b, max(1, target // enc_row), max(1, (budget // 2) // per_row))
    if b >= 2:
        bt = min(bt, pl.cdiv(b, 2))     # keep >=2 'parallel' steps (v7x: 2 TCs)
    return int(max(1, bt)), int(st)


# ---------------------------------------------------------------------------
# Public API
# ---------------------------------------------------------------------------
@functools.partial(jax.jit,
                   static_argnames=("seq_block", "batch_block", "compute_dtype"))
def attn_general_batched(hidden, encoder_outputs, weight, bias, *,
                         seq_block=None, batch_block=None,
                         compute_dtype=jnp.float32):
    """B independent 'general' attention queries.

    hidden:          (B, H1)
    encoder_outputs: (B, S, H0)
    weight:          (H1, H0)   nn.Linear(H0, H1).weight
    bias:            (H1,)      nn.Linear(H0, H1).bias
    returns:         (B, 1, S)  softmax attention weights (float32)
    """
    b, s, h0 = encoder_outputs.shape
    # hidden.(W e + bias) = (hidden W).e + hidden.bias; the bias term is a
    # constant over the sequence axis and softmax is shift-invariant.
    del bias
    v_row = (hidden.astype(jnp.float32)
             @ weight.astype(jnp.float32)).reshape(b, 1, h0)
    enc = encoder_outputs.astype(compute_dtype)
    v_row = v_row.astype(compute_dtype)

    budget = _vmem_budget_bytes()
    row_full = _round_up(s, 8) * _round_up(h0, 128) * 4
    need_seq_tiling = (seq_block is not None) or (2 * row_full > budget // 4)

    if need_seq_tiling:
        bt, st = _pick_seq_tiles(b, s, h0, budget, seq_block)
        return _seq_tiled_call(v_row, enc, bt, st, budget)

    if batch_block is not None:
        bt = max(1, min(int(batch_block), b))
    else:
        bt = _pick_batch_tile(b, s, h0, budget)

    if bt >= b:
        # Tiny problem (e.g. the literal PyTorch case): one invocation, whole
        # arrays in VMEM, no grid / pipeline overhead.
        return _single_shot_call(v_row, enc, budget)

    if batch_block is None and b >= 2:
        bt = min(bt, pl.cdiv(b, 2))     # keep >=2 'parallel' steps (v7x: 2 TCs)
    return _batch_tiled_call(v_row, enc, bt, budget)


def attn_general(hidden, encoder_outputs, weight, bias):
    """Exactly the PyTorch Attn('general', H0, H1).forward:
    (1, H1), (1, S, H0) -> (1, 1, S)."""
    return attn_general_batched(hidden, encoder_outputs, weight, bias)


def _reference(hidden, encoder_outputs, weight, bias):
    """Pure-JAX reference of the PyTorch module (batched over leading dim)."""
    energy = jnp.einsum('bsk,hk->bsh', encoder_outputs, weight) + bias   # (B,S,H1)
    scores = jnp.einsum('bsh,bh->bs', energy, hidden)                    # (B,S)
    return jax.nn.softmax(scores, axis=-1)[:, None, :]                   # (B,1,S)


if __name__ == "__main__":
    key = jax.random.PRNGKey(0)
    ks = jax.random.split(key, 10)

    # ---- literal PyTorch-module shapes ------------------------------------
    seq_len, hidden_size0, hidden_size1 = 8, 32, 32
    hidden = jax.random.normal(ks[0], (1, hidden_size1), dtype=jnp.float32)
    encoder_outputs = jax.random.normal(
        ks[1], (1, seq_len, hidden_size0), dtype=jnp.float32)
    bound = 1.0 / (hidden_size0 ** 0.5)
    weight = jax.random.uniform(ks[2], (hidden_size1, hidden_size0),
                                minval=-bound, maxval=bound, dtype=jnp.float32)
    bias = jax.random.uniform(ks[3], (hidden_size1,),
                              minval=-bound, maxval=bound, dtype=jnp.float32)

    # 1) B=1 path (single no-grid invocation) -- exactly the module forward.
    out = jax.block_until_ready(attn_general(hidden, encoder_outputs, weight, bias))
    ref = _reference(hidden, encoder_outputs, weight, bias)
    assert out.shape == (1, 1, seq_len)
    assert jnp.allclose(out, ref, atol=1e-4, rtol=1e-4), "B=1 single-shot mismatch"

    # 2) Batch-tiled grid path (batch tile forced small to exercise the grid).
    batch = 8
    hidden_b = jax.random.normal(ks[4], (batch, hidden_size1), dtype=jnp.float32)
    enc_b = jax.random.normal(ks[5], (batch, seq_len, hidden_size0),
                              dtype=jnp.float32)
    out_b = jax.block_until_ready(
        attn_general_batched(hidden_b, enc_b, weight, bias, batch_block=2))
    ref_b = _reference(hidden_b, enc_b, weight, bias)
    assert out_b.shape == (batch, 1, seq_len)
    assert jnp.allclose(out_b, ref_b, atol=1e-4, rtol=1e-4), "batch-tiled mismatch"

    # 3) Optional bf16 compute path (contraction in bf16, softmax in f32).
    out_bf16 = jax.block_until_ready(
        attn_general_batched(hidden_b, enc_b, weight, bias,
                             batch_block=2, compute_dtype=jnp.bfloat16))
    assert out_bf16.shape == (batch, 1, seq_len)
    assert jnp.allclose(out_bf16, ref_b, atol=1e-1, rtol=1e-1), "bf16 path mismatch"

    # 4) Sequence-tiled path (forced seq_block; S not a multiple of the tile,
    #    so the padded-column masking is exercised too).
    b2, s2, h02 = 2, 300, 64
    weight2 = jax.random.uniform(ks[6], (hidden_size1, h02),
                                 minval=-bound, maxval=bound, dtype=jnp.float32)
    bias2 = jax.random.uniform(ks[7], (hidden_size1,),
                               minval=-bound, maxval=bound, dtype=jnp.float32)
    hidden_s = jax.random.normal(ks[8], (b2, hidden_size1), dtype=jnp.float32)
    enc_s = jax.random.normal(ks[9], (b2, s2, h02), dtype=jnp.float32)
    out_s = jax.block_until_ready(
        attn_general_batched(hidden_s, enc_s, weight2, bias2, seq_block=128))
    ref_s = _reference(hidden_s, enc_s, weight2, bias2)
    assert out_s.shape == (b2, 1, s2)
    assert jnp.allclose(out_s, ref_s, atol=1e-4, rtol=1e-4), "seq-tiled mismatch"

    print("KERNEL_OK")
</pallas_src>

<mosaic_0001>
module attributes {stable_mosaic.version = 11 : i64} {
  func.func @_scores_softmax_kernel(%arg0: memref<1x1x32xf32, #tpu.memory_space<vmem>>, %arg1: memref<1x8x32xf32, #tpu.memory_space<vmem>>, %arg2: memref<1x1x8xf32, #tpu.memory_space<vmem>>) attributes {dimension_semantics = [], scalar_prefetch = 0 : i64, scratch_operands = 0 : i64, tpu.core_type = #tpu.core_type<tc>} {
    %c0 = arith.constant 0 : index
    %c0_0 = arith.constant 0 : index
    %c0_1 = arith.constant 0 : index
    %0 = vector.load %arg0[%c0, %c0_0, %c0_1] : memref<1x1x32xf32, #tpu.memory_space<vmem>>, vector<1x1x32xf32>
    %c0_2 = arith.constant 0 : index
    %c0_3 = arith.constant 0 : index
    %c0_4 = arith.constant 0 : index
    %1 = vector.load %arg1[%c0_2, %c0_3, %c0_4] : memref<1x8x32xf32, #tpu.memory_space<vmem>>, vector<1x8x32xf32>
    "tpu.trace_start"() <{level = 10 : i32, message = "bqh,bsh->bqs"}> : () -> ()
    %cst = arith.constant dense<0.000000e+00> : vector<1x1x8xf32>
    %2 = tpu.matmul %0, %1, %cst {dimension_numbers = #tpu.dot_dimension_numbers<[2], [2], [1], [1], [0, 0, 0, 1, 1, 1], [0], [0]>} : vector<1x1x32xf32>, vector<1x8x32xf32>, vector<1x1x8xf32> -> vector<1x1x8xf32>
    "tpu.trace_stop"() : () -> ()
    %cst_5 = arith.constant dense<0xFF800000> : vector<1x1xf32>
    %3 = vector.multi_reduction <maximumf>, %2, %cst_5 [2] : vector<1x1x8xf32> to vector<1x1xf32>
    %4 = vector.shape_cast %3 : vector<1x1xf32> to vector<1x1x1xf32>
    %5 = vector.broadcast %4 : vector<1x1x1xf32> to vector<1x1x8xf32>
    %6 = arith.subf %2, %5 : vector<1x1x8xf32>
    %7 = math.exp %6 : vector<1x1x8xf32>
    %cst_6 = arith.constant dense<0.000000e+00> : vector<1x1xf32>
    %8 = vector.multi_reduction <add>, %7, %cst_6 [2] : vector<1x1x8xf32> to vector<1x1xf32>
    %9 = vector.shape_cast %8 : vector<1x1xf32> to vector<1x1x1xf32>
    %10 = vector.broadcast %9 : vector<1x1x1xf32> to vector<1x1x8xf32>
    %11 = arith.divf %7, %10 : vector<1x1x8xf32>
    %c0_7 = arith.constant 0 : index
    %c0_8 = arith.constant 0 : index
    %c0_9 = arith.constant 0 : index
    %12 = vector.load %arg2[%c0_7, %c0_8, %c0_9] : memref<1x1x8xf32, #tpu.memory_space<vmem>>, vector<1x1x8xf32>
    tpu.vector_store %arg2[%c0_7, %c0_8, %c0_9], %11 {strides = array<i32>} : memref<1x1x8xf32, #tpu.memory_space<vmem>>, vector<1x1x8xf32>,
    return
  }
}

</mosaic_0001>

<llo_original>
// kernel: attn_general_batched.1
$region0: #{attn_general_batched.1}
  #allocation0 [shape = 'u32[]', space=smem, size = 0x4, offset = 0x4, fixed_abs, tag = 'smem constant byte address 0x4 - core index']
  #allocation1 [shape = 'u32[144,128]{1,0:T(1,128)}', space=vmem, size = 0x12000, scoped, tag = 'internal scratch']
  %s0 = inlined_call_operand.vmem [shape: f32[1,1,32], index: 0, kind: input, shape index: {}]
  %s1 = inlined_call_operand.vmem [shape: f32[1,8,32], index: 1, kind: input, shape index: {}]
  %s2 = inlined_call_operand.hbm [shape: f32[1,1,8], index: 2, kind: output, shape index: {}]
  %s3 = sld [smem:[#allocation0]]
  $region18: #{attn_general_batched.1} parent=0
    _
  %s5 = ssub.s32 1, %s3
  %s6 = scalar_select 0, %s5, %s3
  $region1: #{attn_general_batched.1} parent=0
    #allocation2 [shape = 'u8[512]{0}', space=vmem, size = 0x400, scoped, tag = 'output window, operand 0, single buffered']
    #allocation3 [shape = 's32[1]{0}', space=sflag, size = 0x4, scoped, tag = 'scoped memory for attn_general_batched.1']
    %7 = vsyncpa [#allocation3], 0
    // Predicated region
    $region2: #{attn_general_batched.1} parent=1 // pred_check
      _
    $region3: #{attn_general_batched.1} parent=1 // pred_check_branch
      %9 = sbr.rel (0) target = $region5
    $region4: #{attn_general_batched.1} parent=1 // pred_region
      _
    $region5: #{attn_general_batched.1} parent=1 // pred_fallthru
      _
    // Predicated region
    $region6: #{attn_general_batched.1} parent=1 // pred_check
      _
    $region7: #{attn_general_batched.1} parent=1 // pred_check_branch
      %11 = sbr.rel (0) target = $region9
    $region8: #{attn_general_batched.1} parent=1 // pred_region
      _
    $region9: #{attn_general_batched.1} parent=1 // pred_fallthru
      _
    %v12 = vld [vmem:[%s0] sm:$0x1]
    %v13 = vld [vmem:[%s1] sm:$0xff]
    %vm14 = vcmask 261120
    %v16 = vsel %vm14, %v12, 0
    %v19 = vsel %vm14, %v13, 0
    %21 = vmatprep.subr.mxu0 0.0
    %22 = vmatpush1.xpose.msra.mxu0 %v19
    %23 = vmatprep.subr.mxu0 0.0
    %24 = vmatpush1.xpose.msra.mxu0 0.0
    %25 = vmatprep.subr.mxu0 0.0
    %26 = vmatpush1.xpose.msra.mxu0 0.0
    %27 = vmatprep.subr.mxu0 0.0
    %28 = vmatpush1.xpose.msra.mxu0 0.0
    %29 = vmatprep.subr.mxu0 0.0
    %30 = vmatpush1.xpose.msra.mxu0 0.0
    %31 = vmatprep.subr.mxu0 0.0
    %32 = vmatpush1.xpose.msra.mxu0 0.0
    %33 = vmatprep.subr.mxu0 0.0
    %34 = vmatpush1.xpose.msra.mxu0 0.0
    %35 = vmatprep.subr.mxu0 0.0
    %36 = vmatpush1.xpose.msra.mxu0 0.0
    %37 = vmatprep.subr.mxu0 0.0
    %38 = vmatpush1.xpose.msra.mxu0 0.0
    %39 = vmatprep.subr.mxu0 0.0
    %40 = vmatpush1.xpose.msra.mxu0 0.0
    %41 = vmatprep.subr.mxu0 0.0
    %42 = vmatpush1.xpose.msra.mxu0 0.0
    %43 = vmatprep.subr.mxu0 0.0
    %44 = vmatpush1.xpose.msra.mxu0 0.0
    %45 = vmatprep.subr.mxu0 0.0
    %46 = vmatpush1.xpose.msra.mxu0 0.0
    %47 = vmatprep.subr.mxu0 0.0
    %48 = vmatpush1.xpose.msra.mxu0 0.0
    %49 = vmatprep.subr.mxu0 0.0
    %50 = vmatpush1.xpose.msra.mxu0 0.0
    %51 = vmatprep.subr.mxu0 0.0
    %52 = vmatpush1.xpose.msra.mxu0 0.0
    %53 = vmatprep.subr.mxu0 0.0
    %54 = vmatpush1.xpose.msra.mxu0 0.0
    %55 = vmatprep.subr.mxu0 0.0
    %56 = vmatpush1.xpose.msra.mxu0 0.0
    %57 = vmatprep.subr.mxu0 0.0
    %58 = vmatpush1.xpose.msra.mxu0 0.0
    %59 = vmatprep.subr.mxu0 0.0
    %60 = vmatpush1.xpose.msra.mxu0 0.0
    %61 = vmatprep.subr.mxu0 0.0
    %62 = vmatpush1.xpose.msra.mxu0 0.0
    %63 = vmatprep.subr.mxu0 0.0
    %64 = vmatpush1.xpose.msra.mxu0 0.0
    %65 = vmatprep.subr.mxu0 0.0
    %66 = vmatpush1.xpose.msra.mxu0 0.0
    %67 = vmatprep.subr.mxu0 0.0
    %68 = vmatpush1.xpose.msra.mxu0 0.0
    %69 = vmatprep.subr.mxu0 0.0
    %70 = vmatpush1.xpose.msra.mxu0 0.0
    %71 = vmatprep.subr.mxu0 0.0
    %72 = vmatpush1.xpose.msra.mxu0 0.0
    %73 = vmatprep.subr.mxu0 0.0
    %74 = vmatpush1.xpose.msra.mxu0 0.0
    %75 = vmatprep.subr.mxu0 0.0
    %76 = vmatpush1.xpose.msra.mxu0 0.0
    %77 = vmatprep.subr.mxu0 0.0
    %78 = vmatpush1.xpose.msra.mxu0 0.0
    %79 = vmatprep.subr.mxu0 0.0
    %80 = vmatpush1.xpose.msra.mxu0 0.0
    %81 = vmatprep.subr.mxu0 0.0
    %82 = vmatpush1.xpose.msra.mxu0 0.0
    %83 = vmatprep.subr.mxu0 0.0
    %84 = vmatpush1.xpose.msra.mxu0 0.0
    %85 = vmatprep.mubr.f32.mxu0 0.0
    %86 = vmatmul.mubr.f32.gmra.mrb[0].mxu0 %v16
    %v87 = vpop.f32.mrb[0].mxu0
    %v88 = vadd.f32 0.0, %v87
    %v89 = vpop.f32.mrb[0].mxu0
    %90 = vdwg.mxu0
    %vm91 = vcmask 57344
    %v92 = vsel %vm91, %v88, -inf
    %93 = vmax.xlane.f32.xlu0 %v92
    %v94 = vpop.xlane.xlu0 %93
    %v95 = vsub.f32 %v88, %v94
    %v96 = vmul.f32 %v95, 1.442695
    %v97 = vpow.pop %v96
    %v98 = vsel %vm91, %v97, 0.0
    %99 = vadd.xlane.f32.xlu0 %v98
    %v100 = vpop.xlane.xlu0 %99
    %v101 = vrcp.pop %v100
    %v102 = vmul.f32 %v97, %v101
    %103 = vst.msk [vmem:[#allocation2] sm:$0x1] %vm91, %v102
    // Predicated region
    $region10: #{attn_general_batched.1} parent=1 // pred_check
      _
    $region11: #{attn_general_batched.1} parent=1 // pred_check_branch
      %105 = sbr.rel (0) target = $region13
    $region12: #{attn_general_batched.1} parent=1 // pred_region
      %s107 = ssub.s32 16, 16
      %108 = vsyncadd [#allocation3], %s107
      %s110 = sshll.u32 [#allocation2], 4
      %s111 = int_to_ptr.vmem [resolvable:$true] %s110
      %113 = dma.vmem_to_hbm [thread:$0]  %s111, 16, %s2, [#allocation3]
    $region13: #{attn_general_batched.1} parent=1 // pred_fallthru
      _
    // Predicated region
    $region14: #{attn_general_batched.1} parent=1 // pred_check
      _
    $region15: #{attn_general_batched.1} parent=1 // pred_check_branch
      %115 = sbr.rel (0) target = $region17
    $region16: #{attn_general_batched.1} parent=1 // pred_region
      %116 = dma.done [#allocation3], 16
    $region17: #{attn_general_batched.1} parent=1 // pred_fallthru
      _
    %117 = vsyncpa [#allocation3], 1

</llo_original>
